<compile_context>
chip_gen: v5e
topology: v5e:2x2
jax: 0.10.0
libtpu: 0.0.40
codegen_flags: <defaults>
</compile_context>

<pallas_src>
import jax
import jax.numpy as jnp
from jax import lax
from jax.experimental import pallas as pl
from jax.experimental.pallas import tpu as pltpu

LN_EPS = 1e-5
N_TORSION = 36          # proj outputs 36 * 2 = 72 channels -> (phi, psi)


def _round_up(x, m):
    return -(-x // m) * m


def _vmem_limit_bytes():
    """Scoped-VMEM limit ~= half of physical VMEM (64 MiB on v5e/v6e's 128 MiB,
    32 MiB on v7x's 64 MiB), with a floor/ceiling for safety."""
    cap = 64 * 1024 * 1024
    try:
        info = pltpu.get_tpu_info()
        cap = int(getattr(info, "vmem_capacity_bytes", cap) or cap)
    except Exception:
        pass
    return int(max(16 * 1024 * 1024, min(cap // 2, 96 * 1024 * 1024)))


def _pick_tile_l(L, N, C, in_itemsize, vmem_limit, batch):
    """Pick the L tile (multiple of 128: lane dim of the output / sublane dim of the
    input) so that the double-buffered, lane-padded input block plus the f32 loop
    temporaries and the output buffers fit comfortably under the scoped-VMEM limit.
    For L < 128 a full-extent block is used (always legal)."""
    if L < 128:
        return L
    c_pad = _round_up(C, 128)                            # VMEM lane padding (C < 128 pads up)
    per_l = 2 * N * c_pad * in_itemsize                  # input block, double-buffered
    per_l += 6 * c_pad * 4                               # f32 N-loop slabs + pooled accumulator
    per_l += 2 * 2 * _round_up(N_TORSION, 8) * 4         # two f32 outputs, double-buffered
    budget = int(vmem_limit * 0.75) - (1 << 20)          # headroom: weights, internal scratch
    tile_l = max(128, (budget // per_l) // 128 * 128)
    tile_l = min(tile_l, _round_up(L, 128))
    # Keep enough grid steps for DMA pipelining and v7x megacore load balance.
    min_steps = 4
    if batch * pl.cdiv(L, tile_l) < min_steps and tile_l > 128:
        tiles_needed = pl.cdiv(min_steps, batch)
        alt = _round_up(pl.cdiv(L, tiles_needed), 128)
        tile_l = max(128, min(tile_l, alt))
    return tile_l


def _torsion_kernel(x_ref, wphi_ref, wpsi_ref, bphi_ref, bpsi_ref, phi_ref, psi_ref):
    # x_ref: (N, TILE_L, C) for the current (batch, L-tile) grid step (batch squeezed).
    n_seq, tile_l, n_feat = x_ref.shape

    # Stream over the N axis: LayerNorm statistics per (TILE_L, C) slab, accumulating
    # the normalized values (no affine -- gamma/beta are folded into W'/b') into the
    # pooled sum.  Keeps live f32 temporaries ~N x smaller than whole-block LN.
    def body(n, acc):
        xs = x_ref[n].astype(jnp.float32)                         # (TILE_L, C)
        mu = jnp.mean(xs, axis=-1, keepdims=True)
        cent = xs - mu
        var = jnp.mean(cent * cent, axis=-1, keepdims=True)       # biased, matches nn.LayerNorm
        return acc + cent * lax.rsqrt(var + LN_EPS)

    pooled = lax.fori_loop(0, n_seq, body,
                           jnp.zeros((tile_l, n_feat), jnp.float32),
                           unroll=True)
    pooled = pooled * (1.0 / n_seq)                               # mean over N (PyTorch dim=1)

    # Projection, produced directly in the permuted, lane-dense (36, TILE_L) layout:
    #   out[o, l] = sum_c W'[o, c] * pooled[l, c]   (== (pooled @ W').T, split in two).
    # Default matmul precision is fine here (pooled data is 1/N of the loaded bytes);
    # pass precision=lax.Precision.HIGHEST if bit-closer f32 parity is ever needed.
    phi = lax.dot_general(wphi_ref[...], pooled,
                          dimension_numbers=(((1,), (1,)), ((), ())),
                          preferred_element_type=jnp.float32)     # (36, TILE_L)
    psi = lax.dot_general(wpsi_ref[...], pooled,
                          dimension_numbers=(((1,), (1,)), ((), ())),
                          preferred_element_type=jnp.float32)     # (36, TILE_L)
    phi_ref[...] = (phi + bphi_ref[...]).astype(phi_ref.dtype)
    psi_ref[...] = (psi + bpsi_ref[...]).astype(psi_ref.dtype)


def torsion_network(x, gamma, beta, w, b):
    """x: (B, N, L, C), float32 or (preferred for this HBM-bound kernel) bfloat16.
    gamma/beta: (C,) LayerNorm affine.  w: (C, 72) (= PyTorch weight.T), b: (72,).
    Returns (logits_phi, logits_psi), each (B, 36, L) float32 -- identical to the
    PyTorch module's forward (the permute(0,2,1) + split are fused into the kernel)."""
    B, N, L, C = x.shape
    out_dim = w.shape[1]            # 72
    half = out_dim // 2             # 36

    # Fold the LN affine into the projection (exact algebra):
    #   mean_n(xhat * g + be) @ W + b == mean_n(xhat) @ (g[:, None] * W) + (be @ W + b)
    gamma32 = gamma.astype(jnp.float32)
    beta32 = beta.astype(jnp.float32)
    w32 = w.astype(jnp.float32)
    w_fold = gamma32[:, None] * w32                               # (C, 72)
    b_fold = b.astype(jnp.float32) + beta32 @ w32                 # (72,)

    wt = jnp.transpose(w_fold)                                    # (72, C) -- tiny, done once
    wt_phi = wt[:half]                                            # (36, C)
    wt_psi = wt[half:]                                            # (36, C)
    b_phi = b_fold[:half].reshape(half, 1)
    b_psi = b_fold[half:].reshape(half, 1)

    vmem_limit = _vmem_limit_bytes()
    tile_l = _pick_tile_l(L, N, C, jnp.dtype(x.dtype).itemsize, vmem_limit, B)
    n_l_tiles = pl.cdiv(L, tile_l)                                # masked tail block if needed

    logits_phi, logits_psi = pl.pallas_call(
        _torsion_kernel,
        out_shape=(jax.ShapeDtypeStruct((B, half, L), jnp.float32),
                   jax.ShapeDtypeStruct((B, half, L), jnp.float32)),
        grid_spec=pltpu.PrefetchScalarGridSpec(
            num_scalar_prefetch=0,
            grid=(B, n_l_tiles),
            in_specs=[
                pl.BlockSpec((None, N, tile_l, C), lambda bi, li: (bi, 0, li, 0)),
                pl.BlockSpec((half, C), lambda bi, li: (0, 0)),
                pl.BlockSpec((half, C), lambda bi, li: (0, 0)),
                pl.BlockSpec((half, 1), lambda bi, li: (0, 0)),
                pl.BlockSpec((half, 1), lambda bi, li: (0, 0)),
            ],
            out_specs=(
                pl.BlockSpec((None, half, tile_l), lambda bi, li: (bi, 0, li)),
                pl.BlockSpec((None, half, tile_l), lambda bi, li: (bi, 0, li)),
            ),
        ),
        compiler_params=pltpu.CompilerParams(
            dimension_semantics=("parallel", "parallel"),
            vmem_limit_bytes=vmem_limit),
    )(x, wt_phi, wt_psi, b_phi, b_psi)

    return logits_phi, logits_psi


def _reference(x, gamma, beta, w, b):
    """Pure-JAX reference of the PyTorch forward for verification."""
    x = x.astype(jnp.float32)
    mean = jnp.mean(x, axis=-1, keepdims=True)
    var = jnp.mean((x - mean) ** 2, axis=-1, keepdims=True)
    xn = (x - mean) / jnp.sqrt(var + LN_EPS) * gamma + beta
    pooled = jnp.mean(xn, axis=1)                                  # (B, L, C)
    proj = pooled @ w.astype(jnp.float32) + b.astype(jnp.float32)  # (B, L, 72)
    logits = jnp.transpose(proj, (0, 2, 1))                        # (B, 72, L)
    return logits[:, :N_TORSION], logits[:, N_TORSION:]


if __name__ == "__main__":
    key = jax.random.PRNGKey(0)

    def run_case(B, N, L, C, dtype, tol):
        k = jax.random.fold_in(key, L * 131 + C)
        kx, kg, kb, kw, kbias = jax.random.split(k, 5)
        OUT = 2 * N_TORSION
        x = jax.random.normal(kx, (B, N, L, C), dtype=jnp.float32).astype(dtype)
        gamma = 1.0 + 0.05 * jax.random.normal(kg, (C,), dtype=jnp.float32)
        beta = 0.05 * jax.random.normal(kb, (C,), dtype=jnp.float32)
        w = 0.1 * jax.random.normal(kw, (C, OUT), dtype=jnp.float32)
        b = 0.1 * jax.random.normal(kbias, (OUT,), dtype=jnp.float32)

        phi, psi = torsion_network(x, gamma, beta, w, b)
        jax.block_until_ready((phi, psi))

        ref_phi, ref_psi = _reference(x, gamma, beta, w, b)
        assert phi.shape == (B, N_TORSION, L) and psi.shape == (B, N_TORSION, L)
        assert jnp.allclose(phi, ref_phi, atol=tol, rtol=tol), \
            float(jnp.max(jnp.abs(phi - ref_phi)))
        assert jnp.allclose(psi, ref_psi, atol=tol, rtol=tol), \
            float(jnp.max(jnp.abs(psi - ref_psi)))

    # Small shape consistent with the module (B, N_seq, L, n_feat): single full-extent
    # L block (L < 128), grid (2, 1).
    run_case(B=2, N=8, L=16, C=32, dtype=jnp.float32, tol=2e-3)
    # Larger f32 shape exercising the L-tiled pipeline (TILE_L=256, grid (2, 2)).
    # Looser tolerance: both kernel and reference run the 256-deep contraction at the
    # TPU's default matmul precision, and gamma/beta are folded into W'/b'.
    run_case(B=2, N=8, L=512, C=256, dtype=jnp.float32, tol=1e-2)
    # bf16 input (preferred HBM-bound path) with L not a multiple of 128: exercises the
    # pl.cdiv grid and the masked tail block (TILE_L=128, grid (2, 2)).
    run_case(B=2, N=8, L=200, C=64, dtype=jnp.bfloat16, tol=1e-2)

    print("KERNEL_OK")
</pallas_src>

<mosaic_0001>
module attributes {stable_mosaic.version = 11 : i64} {
  func.func @_torsion_kernel(%arg0: i32, %arg1: i32, %arg2: memref<1x8x16x32xf32, #tpu.memory_space<vmem>>, %arg3: memref<36x32xf32, #tpu.memory_space<vmem>>, %arg4: memref<36x32xf32, #tpu.memory_space<vmem>>, %arg5: memref<36x1xf32, #tpu.memory_space<vmem>>, %arg6: memref<36x1xf32, #tpu.memory_space<vmem>>, %arg7: memref<1x36x16xf32, #tpu.memory_space<vmem>>, %arg8: memref<1x36x16xf32, #tpu.memory_space<vmem>>) attributes {dimension_semantics = [#tpu.dimension_semantics<parallel>, #tpu.dimension_semantics<parallel>], iteration_bounds = array<i64: 2, 1>, scalar_prefetch = 0 : i64, scratch_operands = 0 : i64, tpu.core_type = #tpu.core_type<tc>, window_params = [{transform_indices = @transform_0, window_bounds = array<i64: 1, 8, 16, 32>}, {pipeline_mode = #tpu.pipeline_mode<synchronous>, transform_indices = @transform_1, window_bounds = array<i64: 36, 32>}, {pipeline_mode = #tpu.pipeline_mode<synchronous>, transform_indices = @transform_2, window_bounds = array<i64: 36, 32>}, {pipeline_mode = #tpu.pipeline_mode<synchronous>, transform_indices = @transform_3, window_bounds = array<i64: 36, 1>}, {pipeline_mode = #tpu.pipeline_mode<synchronous>, transform_indices = @transform_4, window_bounds = array<i64: 36, 1>}, {transform_indices = @transform_5, window_bounds = array<i64: 1, 36, 16>}, {transform_indices = @transform_6, window_bounds = array<i64: 1, 36, 16>}]} {
    %cst = arith.constant 0.000000e+00 : f32
    %0 = vector.broadcast %cst : f32 to vector<16x32xf32>
    %c0_i32 = arith.constant 0 : i32
    %c0 = arith.constant 0 : index
    %1 = arith.index_cast %c0_i32 : i32 to index
    %c0_0 = arith.constant 0 : index
    %c0_1 = arith.constant 0 : index
    %2 = vector.load %arg2[%c0, %1, %c0_0, %c0_1] : memref<1x8x16x32xf32, #tpu.memory_space<vmem>>, vector<1x1x16x32xf32>
    %3 = vector.shape_cast %2 : vector<1x1x16x32xf32> to vector<16x32xf32>
    %cst_2 = arith.constant dense<0.000000e+00> : vector<16xf32>
    %4 = vector.multi_reduction <add>, %3, %cst_2 [1] : vector<16x32xf32> to vector<16xf32>
    %5 = vector.shape_cast %4 : vector<16xf32> to vector<16x1xf32>
    %cst_3 = arith.constant 3.200000e+01 : f32
    %6 = vector.broadcast %cst_3 : f32 to vector<16x1xf32>
    %7 = arith.divf %5, %6 : vector<16x1xf32>
    %8 = vector.broadcast %7 : vector<16x1xf32> to vector<16x32xf32>
    %9 = arith.subf %3, %8 : vector<16x32xf32>
    %10 = arith.mulf %9, %9 : vector<16x32xf32>
    %cst_4 = arith.constant dense<0.000000e+00> : vector<16xf32>
    %11 = vector.multi_reduction <add>, %10, %cst_4 [1] : vector<16x32xf32> to vector<16xf32>
    %12 = vector.shape_cast %11 : vector<16xf32> to vector<16x1xf32>
    %cst_5 = arith.constant 3.200000e+01 : f32
    %13 = vector.broadcast %cst_5 : f32 to vector<16x1xf32>
    %14 = arith.divf %12, %13 : vector<16x1xf32>
    %cst_6 = arith.constant 9.99999974E-6 : f32
    %15 = vector.broadcast %cst_6 : f32 to vector<16x1xf32>
    %16 = arith.addf %14, %15 : vector<16x1xf32>
    %17 = math.rsqrt %16 : vector<16x1xf32>
    %18 = vector.broadcast %17 : vector<16x1xf32> to vector<16x32xf32>
    %19 = arith.mulf %9, %18 : vector<16x32xf32>
    %20 = arith.addf %0, %19 : vector<16x32xf32>
    %c1_i32 = arith.constant 1 : i32
    %c0_7 = arith.constant 0 : index
    %21 = arith.index_cast %c1_i32 : i32 to index
    %c0_8 = arith.constant 0 : index
    %c0_9 = arith.constant 0 : index
    %22 = vector.load %arg2[%c0_7, %21, %c0_8, %c0_9] : memref<1x8x16x32xf32, #tpu.memory_space<vmem>>, vector<1x1x16x32xf32>
    %23 = vector.shape_cast %22 : vector<1x1x16x32xf32> to vector<16x32xf32>
    %cst_10 = arith.constant dense<0.000000e+00> : vector<16xf32>
    %24 = vector.multi_reduction <add>, %23, %cst_10 [1] : vector<16x32xf32> to vector<16xf32>
    %25 = vector.shape_cast %24 : vector<16xf32> to vector<16x1xf32>
    %cst_11 = arith.constant 3.200000e+01 : f32
    %26 = vector.broadcast %cst_11 : f32 to vector<16x1xf32>
    %27 = arith.divf %25, %26 : vector<16x1xf32>
    %28 = vector.broadcast %27 : vector<16x1xf32> to vector<16x32xf32>
    %29 = arith.subf %23, %28 : vector<16x32xf32>
    %30 = arith.mulf %29, %29 : vector<16x32xf32>
    %cst_12 = arith.constant dense<0.000000e+00> : vector<16xf32>
    %31 = vector.multi_reduction <add>, %30, %cst_12 [1] : vector<16x32xf32> to vector<16xf32>
    %32 = vector.shape_cast %31 : vector<16xf32> to vector<16x1xf32>
    %cst_13 = arith.constant 3.200000e+01 : f32
    %33 = vector.broadcast %cst_13 : f32 to vector<16x1xf32>
    %34 = arith.divf %32, %33 : vector<16x1xf32>
    %cst_14 = arith.constant 9.99999974E-6 : f32
    %35 = vector.broadcast %cst_14 : f32 to vector<16x1xf32>
    %36 = arith.addf %34, %35 : vector<16x1xf32>
    %37 = math.rsqrt %36 : vector<16x1xf32>
    %38 = vector.broadcast %37 : vector<16x1xf32> to vector<16x32xf32>
    %39 = arith.mulf %29, %38 : vector<16x32xf32>
    %40 = arith.addf %20, %39 : vector<16x32xf32>
    %c2_i32 = arith.constant 2 : i32
    %c0_15 = arith.constant 0 : index
    %41 = arith.index_cast %c2_i32 : i32 to index
    %c0_16 = arith.constant 0 : index
    %c0_17 = arith.constant 0 : index
    %42 = vector.load %arg2[%c0_15, %41, %c0_16, %c0_17] : memref<1x8x16x32xf32, #tpu.memory_space<vmem>>, vector<1x1x16x32xf32>
    %43 = vector.shape_cast %42 : vector<1x1x16x32xf32> to vector<16x32xf32>
    %cst_18 = arith.constant dense<0.000000e+00> : vector<16xf32>
    %44 = vector.multi_reduction <add>, %43, %cst_18 [1] : vector<16x32xf32> to vector<16xf32>
    %45 = vector.shape_cast %44 : vector<16xf32> to vector<16x1xf32>
    %cst_19 = arith.constant 3.200000e+01 : f32
    %46 = vector.broadcast %cst_19 : f32 to vector<16x1xf32>
    %47 = arith.divf %45, %46 : vector<16x1xf32>
    %48 = vector.broadcast %47 : vector<16x1xf32> to vector<16x32xf32>
    %49 = arith.subf %43, %48 : vector<16x32xf32>
    %50 = arith.mulf %49, %49 : vector<16x32xf32>
    %cst_20 = arith.constant dense<0.000000e+00> : vector<16xf32>
    %51 = vector.multi_reduction <add>, %50, %cst_20 [1] : vector<16x32xf32> to vector<16xf32>
    %52 = vector.shape_cast %51 : vector<16xf32> to vector<16x1xf32>
    %cst_21 = arith.constant 3.200000e+01 : f32
    %53 = vector.broadcast %cst_21 : f32 to vector<16x1xf32>
    %54 = arith.divf %52, %53 : vector<16x1xf32>
    %cst_22 = arith.constant 9.99999974E-6 : f32
    %55 = vector.broadcast %cst_22 : f32 to vector<16x1xf32>
    %56 = arith.addf %54, %55 : vector<16x1xf32>
    %57 = math.rsqrt %56 : vector<16x1xf32>
    %58 = vector.broadcast %57 : vector<16x1xf32> to vector<16x32xf32>
    %59 = arith.mulf %49, %58 : vector<16x32xf32>
    %60 = arith.addf %40, %59 : vector<16x32xf32>
    %c3_i32 = arith.constant 3 : i32
    %c0_23 = arith.constant 0 : index
    %61 = arith.index_cast %c3_i32 : i32 to index
    %c0_24 = arith.constant 0 : index
    %c0_25 = arith.constant 0 : index
    %62 = vector.load %arg2[%c0_23, %61, %c0_24, %c0_25] : memref<1x8x16x32xf32, #tpu.memory_space<vmem>>, vector<1x1x16x32xf32>
    %63 = vector.shape_cast %62 : vector<1x1x16x32xf32> to vector<16x32xf32>
    %cst_26 = arith.constant dense<0.000000e+00> : vector<16xf32>
    %64 = vector.multi_reduction <add>, %63, %cst_26 [1] : vector<16x32xf32> to vector<16xf32>
    %65 = vector.shape_cast %64 : vector<16xf32> to vector<16x1xf32>
    %cst_27 = arith.constant 3.200000e+01 : f32
    %66 = vector.broadcast %cst_27 : f32 to vector<16x1xf32>
    %67 = arith.divf %65, %66 : vector<16x1xf32>
    %68 = vector.broadcast %67 : vector<16x1xf32> to vector<16x32xf32>
    %69 = arith.subf %63, %68 : vector<16x32xf32>
    %70 = arith.mulf %69, %69 : vector<16x32xf32>
    %cst_28 = arith.constant dense<0.000000e+00> : vector<16xf32>
    %71 = vector.multi_reduction <add>, %70, %cst_28 [1] : vector<16x32xf32> to vector<16xf32>
    %72 = vector.shape_cast %71 : vector<16xf32> to vector<16x1xf32>
    %cst_29 = arith.constant 3.200000e+01 : f32
    %73 = vector.broadcast %cst_29 : f32 to vector<16x1xf32>
    %74 = arith.divf %72, %73 : vector<16x1xf32>
    %cst_30 = arith.constant 9.99999974E-6 : f32
    %75 = vector.broadcast %cst_30 : f32 to vector<16x1xf32>
    %76 = arith.addf %74, %75 : vector<16x1xf32>
    %77 = math.rsqrt %76 : vector<16x1xf32>
    %78 = vector.broadcast %77 : vector<16x1xf32> to vector<16x32xf32>
    %79 = arith.mulf %69, %78 : vector<16x32xf32>
    %80 = arith.addf %60, %79 : vector<16x32xf32>
    %c4_i32 = arith.constant 4 : i32
    %c0_31 = arith.constant 0 : index
    %81 = arith.index_cast %c4_i32 : i32 to index
    %c0_32 = arith.constant 0 : index
    %c0_33 = arith.constant 0 : index
    %82 = vector.load %arg2[%c0_31, %81, %c0_32, %c0_33] : memref<1x8x16x32xf32, #tpu.memory_space<vmem>>, vector<1x1x16x32xf32>
    %83 = vector.shape_cast %82 : vector<1x1x16x32xf32> to vector<16x32xf32>
    %cst_34 = arith.constant dense<0.000000e+00> : vector<16xf32>
    %84 = vector.multi_reduction <add>, %83, %cst_34 [1] : vector<16x32xf32> to vector<16xf32>
    %85 = vector.shape_cast %84 : vector<16xf32> to vector<16x1xf32>
    %cst_35 = arith.constant 3.200000e+01 : f32
    %86 = vector.broadcast %cst_35 : f32 to vector<16x1xf32>
    %87 = arith.divf %85, %86 : vector<16x1xf32>
    %88 = vector.broadcast %87 : vector<16x1xf32> to vector<16x32xf32>
    %89 = arith.subf %83, %88 : vector<16x32xf32>
    %90 = arith.mulf %89, %89 : vector<16x32xf32>
    %cst_36 = arith.constant dense<0.000000e+00> : vector<16xf32>
    %91 = vector.multi_reduction <add>, %90, %cst_36 [1] : vector<16x32xf32> to vector<16xf32>
    %92 = vector.shape_cast %91 : vector<16xf32> to vector<16x1xf32>
    %cst_37 = arith.constant 3.200000e+01 : f32
    %93 = vector.broadcast %cst_37 : f32 to vector<16x1xf32>
    %94 = arith.divf %92, %93 : vector<16x1xf32>
    %cst_38 = arith.constant 9.99999974E-6 : f32
    %95 = vector.broadcast %cst_38 : f32 to vector<16x1xf32>
    %96 = arith.addf %94, %95 : vector<16x1xf32>
    %97 = math.rsqrt %96 : vector<16x1xf32>
    %98 = vector.broadcast %97 : vector<16x1xf32> to vector<16x32xf32>
    %99 = arith.mulf %89, %98 : vector<16x32xf32>
    %100 = arith.addf %80, %99 : vector<16x32xf32>
    %c5_i32 = arith.constant 5 : i32
    %c0_39 = arith.constant 0 : index
    %101 = arith.index_cast %c5_i32 : i32 to index
    %c0_40 = arith.constant 0 : index
    %c0_41 = arith.constant 0 : index
    %102 = vector.load %arg2[%c0_39, %101, %c0_40, %c0_41] : memref<1x8x16x32xf32, #tpu.memory_space<vmem>>, vector<1x1x16x32xf32>
    %103 = vector.shape_cast %102 : vector<1x1x16x32xf32> to vector<16x32xf32>
    %cst_42 = arith.constant dense<0.000000e+00> : vector<16xf32>
    %104 = vector.multi_reduction <add>, %103, %cst_42 [1] : vector<16x32xf32> to vector<16xf32>
    %105 = vector.shape_cast %104 : vector<16xf32> to vector<16x1xf32>
    %cst_43 = arith.constant 3.200000e+01 : f32
    %106 = vector.broadcast %cst_43 : f32 to vector<16x1xf32>
    %107 = arith.divf %105, %106 : vector<16x1xf32>
    %108 = vector.broadcast %107 : vector<16x1xf32> to vector<16x32xf32>
    %109 = arith.subf %103, %108 : vector<16x32xf32>
    %110 = arith.mulf %109, %109 : vector<16x32xf32>
    %cst_44 = arith.constant dense<0.000000e+00> : vector<16xf32>
    %111 = vector.multi_reduction <add>, %110, %cst_44 [1] : vector<16x32xf32> to vector<16xf32>
    %112 = vector.shape_cast %111 : vector<16xf32> to vector<16x1xf32>
    %cst_45 = arith.constant 3.200000e+01 : f32
    %113 = vector.broadcast %cst_45 : f32 to vector<16x1xf32>
    %114 = arith.divf %112, %113 : vector<16x1xf32>
    %cst_46 = arith.constant 9.99999974E-6 : f32
    %115 = vector.broadcast %cst_46 : f32 to vector<16x1xf32>
    %116 = arith.addf %114, %115 : vector<16x1xf32>
    %117 = math.rsqrt %116 : vector<16x1xf32>
    %118 = vector.broadcast %117 : vector<16x1xf32> to vector<16x32xf32>
    %119 = arith.mulf %109, %118 : vector<16x32xf32>
    %120 = arith.addf %100, %119 : vector<16x32xf32>
    %c6_i32 = arith.constant 6 : i32
    %c0_47 = arith.constant 0 : index
    %121 = arith.index_cast %c6_i32 : i32 to index
    %c0_48 = arith.constant 0 : index
    %c0_49 = arith.constant 0 : index
    %122 = vector.load %arg2[%c0_47, %121, %c0_48, %c0_49] : memref<1x8x16x32xf32, #tpu.memory_space<vmem>>, vector<1x1x16x32xf32>
    %123 = vector.shape_cast %122 : vector<1x1x16x32xf32> to vector<16x32xf32>
    %cst_50 = arith.constant dense<0.000000e+00> : vector<16xf32>
    %124 = vector.multi_reduction <add>, %123, %cst_50 [1] : vector<16x32xf32> to vector<16xf32>
    %125 = vector.shape_cast %124 : vector<16xf32> to vector<16x1xf32>
    %cst_51 = arith.constant 3.200000e+01 : f32
    %126 = vector.broadcast %cst_51 : f32 to vector<16x1xf32>
    %127 = arith.divf %125, %126 : vector<16x1xf32>
    %128 = vector.broadcast %127 : vector<16x1xf32> to vector<16x32xf32>
    %129 = arith.subf %123, %128 : vector<16x32xf32>
    %130 = arith.mulf %129, %129 : vector<16x32xf32>
    %cst_52 = arith.constant dense<0.000000e+00> : vector<16xf32>
    %131 = vector.multi_reduction <add>, %130, %cst_52 [1] : vector<16x32xf32> to vector<16xf32>
    %132 = vector.shape_cast %131 : vector<16xf32> to vector<16x1xf32>
    %cst_53 = arith.constant 3.200000e+01 : f32
    %133 = vector.broadcast %cst_53 : f32 to vector<16x1xf32>
    %134 = arith.divf %132, %133 : vector<16x1xf32>
    %cst_54 = arith.constant 9.99999974E-6 : f32
    %135 = vector.broadcast %cst_54 : f32 to vector<16x1xf32>
    %136 = arith.addf %134, %135 : vector<16x1xf32>
    %137 = math.rsqrt %136 : vector<16x1xf32>
    %138 = vector.broadcast %137 : vector<16x1xf32> to vector<16x32xf32>
    %139 = arith.mulf %129, %138 : vector<16x32xf32>
    %140 = arith.addf %120, %139 : vector<16x32xf32>
    %c7_i32 = arith.constant 7 : i32
    %c0_55 = arith.constant 0 : index
    %141 = arith.index_cast %c7_i32 : i32 to index
    %c0_56 = arith.constant 0 : index
    %c0_57 = arith.constant 0 : index
    %142 = vector.load %arg2[%c0_55, %141, %c0_56, %c0_57] : memref<1x8x16x32xf32, #tpu.memory_space<vmem>>, vector<1x1x16x32xf32>
    %143 = vector.shape_cast %142 : vector<1x1x16x32xf32> to vector<16x32xf32>
    %cst_58 = arith.constant dense<0.000000e+00> : vector<16xf32>
    %144 = vector.multi_reduction <add>, %143, %cst_58 [1] : vector<16x32xf32> to vector<16xf32>
    %145 = vector.shape_cast %144 : vector<16xf32> to vector<16x1xf32>
    %cst_59 = arith.constant 3.200000e+01 : f32
    %146 = vector.broadcast %cst_59 : f32 to vector<16x1xf32>
    %147 = arith.divf %145, %146 : vector<16x1xf32>
    %148 = vector.broadcast %147 : vector<16x1xf32> to vector<16x32xf32>
    %149 = arith.subf %143, %148 : vector<16x32xf32>
    %150 = arith.mulf %149, %149 : vector<16x32xf32>
    %cst_60 = arith.constant dense<0.000000e+00> : vector<16xf32>
    %151 = vector.multi_reduction <add>, %150, %cst_60 [1] : vector<16x32xf32> to vector<16xf32>
    %152 = vector.shape_cast %151 : vector<16xf32> to vector<16x1xf32>
    %cst_61 = arith.constant 3.200000e+01 : f32
    %153 = vector.broadcast %cst_61 : f32 to vector<16x1xf32>
    %154 = arith.divf %152, %153 : vector<16x1xf32>
    %cst_62 = arith.constant 9.99999974E-6 : f32
    %155 = vector.broadcast %cst_62 : f32 to vector<16x1xf32>
    %156 = arith.addf %154, %155 : vector<16x1xf32>
    %157 = math.rsqrt %156 : vector<16x1xf32>
    %158 = vector.broadcast %157 : vector<16x1xf32> to vector<16x32xf32>
    %159 = arith.mulf %149, %158 : vector<16x32xf32>
    %160 = arith.addf %140, %159 : vector<16x32xf32>
    %c8_i32 = arith.constant 8 : i32
    %cst_63 = arith.constant 1.250000e-01 : f32
    %161 = vector.broadcast %cst_63 : f32 to vector<16x32xf32>
    %162 = arith.mulf %160, %161 : vector<16x32xf32>
    %c0_64 = arith.constant 0 : index
    %c0_65 = arith.constant 0 : index
    %163 = vector.load %arg3[%c0_64, %c0_65] : memref<36x32xf32, #tpu.memory_space<vmem>>, vector<36x32xf32>
    %cst_66 = arith.constant dense<0.000000e+00> : vector<36x16xf32>
    %164 = tpu.matmul %163, %162, %cst_66 {dimension_numbers = #tpu.dot_dimension_numbers<[1], [1], [0], [0], [0, 0, 1, 0], [], []>} : vector<36x32xf32>, vector<16x32xf32>, vector<36x16xf32> -> vector<36x16xf32>
    %c0_67 = arith.constant 0 : index
    %c0_68 = arith.constant 0 : index
    %165 = vector.load %arg4[%c0_67, %c0_68] : memref<36x32xf32, #tpu.memory_space<vmem>>, vector<36x32xf32>
    %cst_69 = arith.constant dense<0.000000e+00> : vector<36x16xf32>
    %166 = tpu.matmul %165, %162, %cst_69 {dimension_numbers = #tpu.dot_dimension_numbers<[1], [1], [0], [0], [0, 0, 1, 0], [], []>} : vector<36x32xf32>, vector<16x32xf32>, vector<36x16xf32> -> vector<36x16xf32>
    %c0_70 = arith.constant 0 : index
    %c0_71 = arith.constant 0 : index
    %167 = vector.load %arg5[%c0_70, %c0_71] : memref<36x1xf32, #tpu.memory_space<vmem>>, vector<36x1xf32>
    %168 = vector.broadcast %167 : vector<36x1xf32> to vector<36x16xf32>
    %169 = arith.addf %164, %168 : vector<36x16xf32>
    %c0_72 = arith.constant 0 : index
    %c0_73 = arith.constant 0 : index
    %c0_74 = arith.constant 0 : index
    %170 = vector.load %arg7[%c0_72, %c0_73, %c0_74] : memref<1x36x16xf32, #tpu.memory_space<vmem>>, vector<1x36x16xf32>
    %171 = vector.shape_cast %170 : vector<1x36x16xf32> to vector<36x16xf32>
    %172 = vector.shape_cast %169 : vector<36x16xf32> to vector<1x36x16xf32>
    tpu.vector_store %arg7[%c0_72, %c0_73, %c0_74], %172 {strides = array<i32>} : memref<1x36x16xf32, #tpu.memory_space<vmem>>, vector<1x36x16xf32>,
    %c0_75 = arith.constant 0 : index
    %c0_76 = arith.constant 0 : index
    %173 = vector.load %arg6[%c0_75, %c0_76] : memref<36x1xf32, #tpu.memory_space<vmem>>, vector<36x1xf32>
    %174 = vector.broadcast %173 : vector<36x1xf32> to vector<36x16xf32>
    %175 = arith.addf %166, %174 : vector<36x16xf32>
    %c0_77 = arith.constant 0 : index
    %c0_78 = arith.constant 0 : index
    %c0_79 = arith.constant 0 : index
    %176 = vector.load %arg8[%c0_77, %c0_78, %c0_79] : memref<1x36x16xf32, #tpu.memory_space<vmem>>, vector<1x36x16xf32>
    %177 = vector.shape_cast %176 : vector<1x36x16xf32> to vector<36x16xf32>
    %178 = vector.shape_cast %175 : vector<36x16xf32> to vector<1x36x16xf32>
    tpu.vector_store %arg8[%c0_77, %c0_78, %c0_79], %178 {strides = array<i32>} : memref<1x36x16xf32, #tpu.memory_space<vmem>>, vector<1x36x16xf32>,
    return
  }
  func.func @transform_0(%arg0: i32, %arg1: i32) -> (i32, i32, i32, i32) {
    %c0_i32 = arith.constant 0 : i32
    %c0_i32_0 = arith.constant 0 : i32
    %c0_i32_1 = arith.constant 0 : i32
    return %arg0, %c0_i32, %arg1, %c0_i32_0 : i32, i32, i32, i32
  }
  func.func @transform_1(%arg0: i32, %arg1: i32) -> (i32, i32) {
    %c0_i32 = arith.constant 0 : i32
    %c0_i32_0 = arith.constant 0 : i32
    %c0_i32_1 = arith.constant 0 : i32
    return %c0_i32, %c0_i32_0 : i32, i32
  }
  func.func @transform_2(%arg0: i32, %arg1: i32) -> (i32, i32) {
    %c0_i32 = arith.constant 0 : i32
    %c0_i32_0 = arith.constant 0 : i32
    %c0_i32_1 = arith.constant 0 : i32
    return %c0_i32, %c0_i32_0 : i32, i32
  }
  func.func @transform_3(%arg0: i32, %arg1: i32) -> (i32, i32) {
    %c0_i32 = arith.constant 0 : i32
    %c0_i32_0 = arith.constant 0 : i32
    %c0_i32_1 = arith.constant 0 : i32
    return %c0_i32, %c0_i32_0 : i32, i32
  }
  func.func @transform_4(%arg0: i32, %arg1: i32) -> (i32, i32) {
    %c0_i32 = arith.constant 0 : i32
    %c0_i32_0 = arith.constant 0 : i32
    %c0_i32_1 = arith.constant 0 : i32
    return %c0_i32, %c0_i32_0 : i32, i32
  }
  func.func @transform_5(%arg0: i32, %arg1: i32) -> (i32, i32, i32) {
    %c0_i32 = arith.constant 0 : i32
    %c0_i32_0 = arith.constant 0 : i32
    return %arg0, %c0_i32, %arg1 : i32, i32, i32
  }
  func.func @transform_6(%arg0: i32, %arg1: i32) -> (i32, i32, i32) {
    %c0_i32 = arith.constant 0 : i32
    %c0_i32_0 = arith.constant 0 : i32
    return %arg0, %c0_i32, %arg1 : i32, i32, i32
  }
}

</mosaic_0001>

<llo_original>
// kernel: tpu_custom_call.1
$region0: #{tpu_custom_call.1}
  #allocation0 [shape = 'u32[]', space=smem, size = 0x4, offset = 0x4, fixed_abs, tag = 'smem constant byte address 0x4 - core index']
  #allocation1 [shape = 'u32[72,128]{1,0:T(1,128)}', space=vmem, size = 0x9000, scoped, tag = 'internal scratch']
  %s0 = inlined_call_operand.hbm [shape: f32[2,8,16,32], index: 0, kind: input, shape index: {}]
  %s1 = inlined_call_operand.vmem [shape: f32[36,32], index: 1, kind: input, shape index: {}]
  %s2 = inlined_call_operand.vmem [shape: f32[36,32], index: 2, kind: input, shape index: {}]
  %s3 = inlined_call_operand.vmem [shape: f32[36,1], index: 3, kind: input, shape index: {}]
  %s4 = inlined_call_operand.vmem [shape: f32[36,1], index: 4, kind: input, shape index: {}]
  %s5 = inlined_call_operand.vmem [shape: f32[2,36,16], index: 5, kind: output, shape index: {0}]
  %s6 = inlined_call_operand.vmem [shape: f32[2,36,16], index: 6, kind: output, shape index: {1}]
  %7 = xla_tuple %s5, %s6
  %s8 = sld [smem:[#allocation0]]
  $region65: #{tpu_custom_call.1} parent=0
    _
  %s10 = ssub.s32 1, %s8
  %s11 = scalar_select 0, %s10, %s8
  $region1: #{tpu_custom_call.1} parent=0
    #allocation2 [shape = 'u8[131072]{0}', space=vmem, size = 0x20000, scoped, tag = 'input window, operand 0']
    #allocation3 [shape = 's32[2]{0}', space=sflag, size = 0x8, scoped, tag = 'scoped memory for tpu_custom_call.1']
    %12 = vsyncpa [#allocation3], 0
    %s13 = scalar_lea.sflag [#allocation3], 1
    %14 = vsyncpa %s13, 0
    loop: start=0, step=1, limit=4
    $region2: #{tpu_custom_call.1} parent=1 // loop_pre_header
      _
    $region3: #{tpu_custom_call.1} parent=1 // loop_header
      %s16 = sphi 0, %s20
      %p17 = scmp.ge.s32.totalorder %s16, 4
      %s23 = sphi 0, %s35
      %s24 = sphi 0, %s31
      %s25 = sphi 0, %s23
      %s26 = sphi 0, %s24
      %s27 = sphi 0, %s25
      %s28 = sphi 0, %s26
      %s40 = sphi 0, %s42
      %s43 = sphi 0, %s40
      %s44 = sphi 0, %s43
      %s60 = sphi 0, %s44
      %s64 = sphi 0, %s64
      %s66 = sphi 0, %s64
      %s67 = sphi 0, %s66
      %s81 = sphi 0, %s67
      %s85 = sphi 0, %s85
      %s87 = sphi 0, %s85
      %s88 = sphi 0, %s87
      %s102 = sphi 0, %s88
      %s106 = sphi 0, %s106
      %s108 = sphi 0, %s106
      %s109 = sphi 0, %s108
      %s123 = sphi 0, %s109
      %s127 = sphi 0, %s127
      %s129 = sphi 0, %s127
      %s130 = sphi 0, %s129
      %s144 = sphi 0, %s130
      %s152 = sphi 0, %s154
      %s155 = sphi 0, %s152
      %s156 = sphi 0, %s155
      %s172 = sphi 0, %s156
      %s180 = sphi 0, %s182
      %s183 = sphi 0, %s180
      %s184 = sphi 0, %s183
      %s200 = sphi 0, %s184
    $region4: #{tpu_custom_call.1} parent=1 // loop_header_branch
      %19 = sbr.rel (%p17) target = $region8
    $region5: #{tpu_custom_call.1} parent=1 // loop_body
      %s21 = ssub.s32 %s16, 1
      %s22 = ssub.s32 %s16, 2
      %s29 = sadd.s32 1, %s24
      %p30 = scmp.ge.s32.totalorder %s29, 1
      %s31 = scalar_select %p30, 0, %s29
      %s32 = sadd.s32 1, %s23
      %s33 = scalar_select %p30, %s32, %s23
      %p34 = scmp.ge.s32.totalorder %s33, 2
      %s35 = scalar_select %p34, 0, %s33
      %s36 = ssub.s32 %s23, %s35
      %s37 = ssub.s32 %s24, %s31
      %s38 = sor.u32 %s36, %s37
      %p39 = scmp.eq.s32.totalorder %s38, 0
      %s41 = sadd.s32 %s40, 1
      %s42 = scalar_select %p39, %s40, %s41
      %p45 = pneg %p39
      %p46 = scmp.eq.s32.totalorder %s16, 1
      %p47 = por %p45, %p46
      %p48 = scmp.ne.s32.totalorder %s40, %s43
      %p49 = scmp.eq.s32.totalorder %s16, 0
      %p50 = por %p48, %p49
      %p51 = scmp.ne.s32.totalorder %s40, %s43
      %p52 = scmp.eq.s32.totalorder %s21, 1
      %p53 = por %p51, %p52
      %p54 = scmp.ne.s32.totalorder %s43, %s44
      %p55 = scmp.eq.s32.totalorder %s21, 0
      %p56 = por %p54, %p55
      %p57 = scmp.ne.s32.totalorder %s43, %s44
      %p58 = scmp.eq.s32.totalorder %s22, 1
      %p59 = por %p57, %p58
      %p61 = scmp.ne.s32.totalorder %s44, %s60
      %p62 = scmp.eq.s32.totalorder %s22, 0
      %p63 = por %p61, %p62
      %s65 = sadd.s32 %s64, 1
      %p68 = scmp.eq.s32.totalorder %s16, 1
      %p69 = scmp.ne.s32.totalorder %s64, %s66
      %p70 = scmp.eq.s32.totalorder %s16, 0
      %p71 = por %p69, %p70
      %p72 = scmp.ne.s32.totalorder %s64, %s66
      %p73 = scmp.eq.s32.totalorder %s21, 1
      %p74 = por %p72, %p73
      %p75 = scmp.ne.s32.totalorder %s66, %s67
      %p76 = scmp.eq.s32.totalorder %s21, 0
      %p77 = por %p75, %p76
      %p78 = scmp.ne.s32.totalorder %s66, %s67
      %p79 = scmp.eq.s32.totalorder %s22, 1
      %p80 = por %p78, %p79
      %p82 = scmp.ne.s32.totalorder %s67, %s81
      %p83 = scmp.eq.s32.totalorder %s22, 0
      %p84 = por %p82, %p83
      %s86 = sadd.s32 %s85, 1
      %p89 = scmp.eq.s32.totalorder %s16, 1
      %p90 = scmp.ne.s32.totalorder %s85, %s87
      %p91 = scmp.eq.s32.totalorder %s16, 0
      %p92 = por %p90, %p91
      %p93 = scmp.ne.s32.totalorder %s85, %s87
      %p94 = scmp.eq.s32.totalorder %s21, 1
      %p95 = por %p93, %p94
      %p96 = scmp.ne.s32.totalorder %s87, %s88
      %p97 = scmp.eq.s32.totalorder %s21, 0
      %p98 = por %p96, %p97
      %p99 = scmp.ne.s32.totalorder %s87, %s88
      %p100 = scmp.eq.s32.totalorder %s22, 1
      %p101 = por %p99, %p100
      %p103 = scmp.ne.s32.totalorder %s88, %s102
      %p104 = scmp.eq.s32.totalorder %s22, 0
      %p105 = por %p103, %p104
      %s107 = sadd.s32 %s106, 1
      %p110 = scmp.eq.s32.totalorder %s16, 1
      %p111 = scmp.ne.s32.totalorder %s106, %s108
      %p112 = scmp.eq.s32.totalorder %s16, 0
      %p113 = por %p111, %p112
      %p114 = scmp.ne.s32.totalorder %s106, %s108
      %p115 = scmp.eq.s32.totalorder %s21, 1
      %p116 = por %p114, %p115
      %p117 = scmp.ne.s32.totalorder %s108, %s109
      %p118 = scmp.eq.s32.totalorder %s21, 0
      %p119 = por %p117, %p118
      %p120 = scmp.ne.s32.totalorder %s108, %s109
      %p121 = scmp.eq.s32.totalorder %s22, 1
      %p122 = por %p120, %p121
      %p124 = scmp.ne.s32.totalorder %s109, %s123
      %p125 = scmp.eq.s32.totalorder %s22, 0
      %p126 = por %p124, %p125
      %s128 = sadd.s32 %s127, 1
      %p131 = scmp.eq.s32.totalorder %s16, 1
      %p132 = scmp.ne.s32.totalorder %s127, %s129
      %p133 = scmp.eq.s32.totalorder %s16, 0
      %p134 = por %p132, %p133
      %p135 = scmp.ne.s32.totalorder %s127, %s129
      %p136 = scmp.eq.s32.totalorder %s21, 1
      %p137 = por %p135, %p136
      %p138 = scmp.ne.s32.totalorder %s129, %s130
      %p139 = scmp.eq.s32.totalorder %s21, 0
      %p140 = por %p138, %p139
      %p141 = scmp.ne.s32.totalorder %s129, %s130
      %p142 = scmp.eq.s32.totalorder %s22, 1
      %p143 = por %p141, %p142
      %p145 = scmp.ne.s32.totalorder %s130, %s144
      %p146 = scmp.eq.s32.totalorder %s22, 0
      %p147 = por %p145, %p146
      %s148 = ssub.s32 %s23, %s35
      %s149 = ssub.s32 %s24, %s31
      %s150 = sor.u32 %s148, %s149
      %p151 = scmp.eq.s32.totalorder %s150, 0
      %s153 = sadd.s32 %s152, 1
      %s154 = scalar_select %p151, %s152, %s153
      %p157 = pneg %p151
      %p158 = scmp.eq.s32.totalorder %s16, 1
      %p159 = por %p157, %p158
      %p160 = scmp.ne.s32.totalorder %s152, %s155
      %p161 = scmp.eq.s32.totalorder %s16, 0
      %p162 = por %p160, %p161
      %p163 = scmp.ne.s32.totalorder %s152, %s155
      %p164 = scmp.eq.s32.totalorder %s21, 1
      %p165 = por %p163, %p164
      %p166 = scmp.ne.s32.totalorder %s155, %s156
      %p167 = scmp.eq.s32.totalorder %s21, 0
      %p168 = por %p166, %p167
      %p169 = scmp.ne.s32.totalorder %s155, %s156
      %p170 = scmp.eq.s32.totalorder %s22, 1
      %p171 = por %p169, %p170
      %p173 = scmp.ne.s32.totalorder %s156, %s172
      %p174 = scmp.eq.s32.totalorder %s22, 0
      %p175 = por %p173, %p174
      %s176 = ssub.s32 %s23, %s35
      %s177 = ssub.s32 %s24, %s31
      %s178 = sor.u32 %s176, %s177
      %p179 = scmp.eq.s32.totalorder %s178, 0
      %s181 = sadd.s32 %s180, 1
      %s182 = scalar_select %p179, %s180, %s181
      %p185 = pneg %p179
      %p186 = scmp.eq.s32.totalorder %s16, 1
      %p187 = por %p185, %p186
      %p188 = scmp.ne.s32.totalorder %s180, %s183
      %p189 = scmp.eq.s32.totalorder %s16, 0
      %p190 = por %p188, %p189
      %p191 = scmp.ne.s32.totalorder %s180, %s183
      %p192 = scmp.eq.s32.totalorder %s21, 1
      %p193 = por %p191, %p192
      %p194 = scmp.ne.s32.totalorder %s183, %s184
      %p195 = scmp.eq.s32.totalorder %s21, 0
      %p196 = por %p194, %p195
      %p197 = scmp.ne.s32.totalorder %s183, %s184
      %p198 = scmp.eq.s32.totalorder %s22, 1
      %p199 = por %p197, %p198
      %p201 = scmp.ne.s32.totalorder %s184, %s200
      %p202 = scmp.eq.s32.totalorder %s22, 0
      %p203 = por %p201, %p202
      %p204 = scmp.le.s32.totalorder 1, %s16
      %p205 = scmp.lt.s32.totalorder %s16, 3
      %p206 = pnand %p204, %p205
      %p207 = pneg %p206
      // Predicated region
      $region9: #{tpu_custom_call.1} parent=5 // pred_check
        _
      $region10: #{tpu_custom_call.1} parent=5 // pred_check_branch
        %209 = sbr.rel (%p206) target = $region12
      $region11: #{tpu_custom_call.1} parent=5 // pred_region
        %s210 = ssub.s32 %s16, 1
        // Predicated region
        $region13: #{tpu_custom_call.1} parent=11 // pred_check
          %p211 = pneg %p77
        $region14: #{tpu_custom_call.1} parent=11 // pred_check_branch
          %213 = sbr.rel (%p211) target = $region16
        $region15: #{tpu_custom_call.1} parent=11 // pred_region
          _
        $region16: #{tpu_custom_call.1} parent=11 // pred_fallthru
          _
        // Predicated region
        $region17: #{tpu_custom_call.1} parent=11 // pred_check
          %p214 = pneg %p98
        $region18: #{tpu_custom_call.1} parent=11 // pred_check_branch
          %216 = sbr.rel (%p214) target = $region20
        $region19: #{tpu_custom_call.1} parent=11 // pred_region
          _
        $region20: #{tpu_custom_call.1} parent=11 // pred_fallthru
          _
        // Predicated region
        $region21: #{tpu_custom_call.1} parent=11 // pred_check
          %p217 = pneg %p119
        $region22: #{tpu_custom_call.1} parent=11 // pred_check_branch
          %219 = sbr.rel (%p217) target = $region24
        $region23: #{tpu_custom_call.1} parent=11 // pred_region
          _
        $region24: #{tpu_custom_call.1} parent=11 // pred_fallthru
          _
        // Predicated region
        $region25: #{tpu_custom_call.1} parent=11 // pred_check
          %p220 = pneg %p140
        $region26: #{tpu_custom_call.1} parent=11 // pred_check_branch
          %222 = sbr.rel (%p220) target = $region28
        $region27: #{tpu_custom_call.1} parent=11 // pred_region
          _
        $region28: #{tpu_custom_call.1} parent=11 // pred_fallthru
          _
      $region12: #{tpu_custom_call.1} parent=5 // pred_fallthru
        _
      %p223 = scmp.lt.s32.totalorder %s16, 2
      // Predicated region
      $region29: #{tpu_custom_call.1} parent=5 // pred_check
        %p224 = pneg %p223
      $region30: #{tpu_custom_call.1} parent=5 // pred_check_branch
        %226 = sbr.rel (%p224) target = $region32
      $region31: #{tpu_custom_call.1} parent=5 // pred_region
        // Predicated region
        $region33: #{tpu_custom_call.1} parent=31 // pred_check
          %p227 = pneg %p50
        $region34: #{tpu_custom_call.1} parent=31 // pred_check_branch
          %229 = sbr.rel (%p227) target = $region36
        $region35: #{tpu_custom_call.1} parent=31 // pred_region
          %s230 = sand.u32 %s40, 1
          %s231 = scalar_lea.sflag [#allocation3], %s230
          %s232 = sand.u32 %s40, 1
          %s233 = smul.addr %s232, 128
          %s234 = scalar_lea.vmem [#allocation2], %s233
          %s235 = smul.u32 2, %s24
          %237 = vsyncadd %s231, 0
          %s238 = smul.addr %s23, 16
          %s239 = sadd.s32 %s235, %s238
          %s240 = smul.addr %s239, 8
          %s241 = scalar_lea.hbm %s0, %s240
          %s242 = sshll.u32 %s241, 4
          %s243 = int_to_ptr.hbm [resolvable:$true] %s242
          %s244 = sshll.u32 %s234, 4
          %s245 = int_to_ptr.vmem [resolvable:$true] %s244
          %250 = dma.hbm_to_vmem [thread:$0]  %s243, 2048, %s245, %s231, 128, 128, 8
        $region36: #{tpu_custom_call.1} parent=31 // pred_fallthru
          _
      $region32: #{tpu_custom_call.1} parent=5 // pred_fallthru
        _
      %p251 = scmp.le.s32.totalorder 1, %s16
      %p252 = scmp.lt.s32.totalorder %s16, 3
      %p253 = pnand %p251, %p252
      %p254 = pneg %p253
      // Predicated region
      $region37: #{tpu_custom_call.1} parent=5 // pred_check
        _
      $region38: #{tpu_custom_call.1} parent=5 // pred_check_branch
        %256 = sbr.rel (%p253) target = $region40
      $region39: #{tpu_custom_call.1} parent=5 // pred_region
        %s257 = ssub.s32 %s16, 1
        %s258 = sand.u32 %s43, 1
        %s259 = scalar_lea.sflag [#allocation3], %s258
        %s260 = sand.u32 %s43, 1
        %s261 = smul.addr %s260, 128
        %s262 = scalar_lea.vmem [#allocation2], %s261
        // Predicated region
        $region41: #{tpu_custom_call.1} parent=39 // pred_check
          %p263 = pneg %p56
        $region42: #{tpu_custom_call.1} parent=39 // pred_check_branch
          %265 = sbr.rel (%p263) target = $region44
        $region43: #{tpu_custom_call.1} parent=39 // pred_region
          %267 = dma.done %s259, 2048
        $region44: #{tpu_custom_call.1} parent=39 // pred_fallthru
          _
        %s268 = sand.u32 %s43, 1
        %s269 = scalar_lea.sflag [#allocation3], %s268
        %s270 = sand.u32 %s43, 1
        %s271 = smul.addr %s270, 128
        %s272 = scalar_lea.vmem [#allocation2], %s271
        %p273 = pneg %p56
        %p274 = pneg %p53
        %p275 = pneg %p77
        %p276 = pneg %p74
        %p277 = pneg %p98
        %p278 = pneg %p95
        %p279 = pneg %p119
        %p280 = pneg %p116
        %p281 = pneg %p140
        %p282 = pneg %p137
        %p283 = pneg %p168
        %p284 = pneg %p165
        %p285 = scmp.lt.s32.totalorder %s25, 1
        %s286 = scalar_select %p285, %s25, 1
        %p287 = scmp.lt.s32.totalorder %s26, 0
        %s288 = scalar_select %p287, %s26, 0
        %s289 = smul.addr %s286, 5
        %s290 = sadd.s32 %s288, %s289
        %s291 = smul.addr %s290, 8
        %s292 = scalar_lea.vmem %s5, %s291
        %p293 = pneg %p196
        %p294 = pneg %p193
        %p295 = scmp.lt.s32.totalorder %s25, 1
        %s296 = scalar_select %p295, %s25, 1
        %p297 = scmp.lt.s32.totalorder %s26, 0
        %s298 = scalar_select %p297, %s26, 0
        %s299 = smul.addr %s296, 5
        %s300 = sadd.s32 %s298, %s299
        %s301 = smul.addr %s300, 8
        %s302 = scalar_lea.vmem %s6, %s301
        %s303 = smul.u32 2, %s26
        %p304 = scmp.lt.s32.totalorder %s25, 1
        %s305 = scalar_select %p304, %s25, 1
        %p306 = scmp.lt.s32.totalorder %s26, 0
        %s307 = scalar_select %p306, %s26, 0
        %s308 = smul.addr %s305, 5
        %s309 = sadd.s32 %s307, %s308
        %s310 = smul.addr %s309, 8
        %s311 = scalar_lea.vmem %s5, %s310
        %p312 = scmp.lt.s32.totalorder %s25, 1
        %s313 = scalar_select %p312, %s25, 1
        %p314 = scmp.lt.s32.totalorder %s26, 0
        %s315 = scalar_select %p314, %s26, 0
        %s316 = smul.addr %s313, 5
        %s317 = sadd.s32 %s315, %s316
        %s318 = smul.addr %s317, 8
        %s319 = scalar_lea.vmem %s6, %s318
        %v320 = vld [vmem:[%s262] sm:$0xff]
        %v321 = vld [vmem:[%s262 + $0x8] sm:$0xff]
        %vm322 = vcmask 261120
        %v323 = vsel %vm322, %v320, 0.0
        %324 = vadd.xlane.f32.xlu0 %v323
        %v325 = vpop.xlane.xlu0 %324
        %v326 = vsel %vm322, %v321, 0.0
        %327 = vadd.xlane.f32.xlu0 %v326
        %v328 = vpop.xlane.xlu0 %327
        %v329 = vrcp.pop 32.0
        %v330 = vmul.f32 32.0, %v329
        %v331 = vsub.f32 1.0, %v330
        %v332 = vmul.f32 %v329, %v331
        %v333 = vadd.f32 %v329, %v332
        %vm334 = vweird.f32 %v329
        %v335 = vsel %vm334, %v329, %v333
        %v336 = vmul.f32 %v325, %v335
        %v337 = vmul.f32 %v328, %v335
        %v338 = vsub.f32 %v320, %v336
        %v339 = vsub.f32 %v321, %v337
        %v340 = vmul.f32 %v338, %v338
        %v341 = vmul.f32 %v339, %v339
        %v342 = vsel %vm322, %v340, 0.0
        %343 = vadd.xlane.f32.xlu0 %v342
        %v344 = vpop.xlane.xlu0 %343
        %v345 = vsel %vm322, %v341, 0.0
        %346 = vadd.xlane.f32.xlu0 %v345
        %v347 = vpop.xlane.xlu0 %346
        %v348 = vmul.f32 %v344, %v335
        %v349 = vmul.f32 %v347, %v335
        %v350 = vadd.f32 %v348, 1e-05
        %v351 = vadd.f32 %v349, 1e-05
        %v352 = vrsqrt.pop %v350
        %v353 = vmul.f32 %v352, %v350
        %v354 = vmul.f32 %v353, %v352
        %v355 = vmul.f32 0.5, %v354
        %v356 = vsub.f32 1.5, %v355
        %v357 = vmul.f32 %v352, %v356
        %vm358 = vweird.f32 %v350
        %vm359 = vweird.f32 %v352
        %vm360 = vmor %vm358, %vm359
        %v361 = vsel %vm360, %v352, %v357
        %v362 = vrsqrt.pop %v351
        %v363 = vmul.f32 %v362, %v351
        %v364 = vmul.f32 %v363, %v362
        %v365 = vmul.f32 0.5, %v364
        %v366 = vsub.f32 1.5, %v365
        %v367 = vmul.f32 %v362, %v366
        %vm368 = vweird.f32 %v351
        %vm369 = vweird.f32 %v362
        %vm370 = vmor %vm368, %vm369
        %v371 = vsel %vm370, %v362, %v367
        %v372 = vmul.f32 %v338, %v361
        %v373 = vmul.f32 %v339, %v371
        %v374 = vadd.f32 %v372, 0.0
        %v375 = vadd.f32 %v373, 0.0
        %s376 = scalar_lea.vmem %s262, 16 [#allocation2]
        %v377 = vld [vmem:[%s376] sm:$0xff]
        %v378 = vld [vmem:[%s376 + $0x8] sm:$0xff]
        %v379 = vsel %vm322, %v377, 0.0
        %380 = vadd.xlane.f32.xlu0 %v379
        %v381 = vpop.xlane.xlu0 %380
        %v382 = vsel %vm322, %v378, 0.0
        %383 = vadd.xlane.f32.xlu0 %v382
        %v384 = vpop.xlane.xlu0 %383
        %v385 = vmul.f32 %v381, %v335
        %v386 = vmul.f32 %v384, %v335
        %v387 = vsub.f32 %v377, %v385
        %v388 = vsub.f32 %v378, %v386
        %v389 = vmul.f32 %v387, %v387
        %v390 = vmul.f32 %v388, %v388
        %v391 = vsel %vm322, %v389, 0.0
        %392 = vadd.xlane.f32.xlu0 %v391
        %v393 = vpop.xlane.xlu0 %392
        %v394 = vsel %vm322, %v390, 0.0
        %395 = vadd.xlane.f32.xlu0 %v394
        %v396 = vpop.xlane.xlu0 %395
        %v397 = vmul.f32 %v393, %v335
        %v398 = vmul.f32 %v396, %v335
        %v399 = vadd.f32 %v397, 1e-05
        %v400 = vadd.f32 %v398, 1e-05
        %v401 = vrsqrt.pop %v399
        %v402 = vmul.f32 %v401, %v399
        %v403 = vmul.f32 %v402, %v401
        %v404 = vmul.f32 0.5, %v403
        %v405 = vsub.f32 1.5, %v404
        %v406 = vmul.f32 %v401, %v405
        %vm407 = vweird.f32 %v399
        %vm408 = vweird.f32 %v401
        %vm409 = vmor %vm407, %vm408
        %v410 = vsel %vm409, %v401, %v406
        %v411 = vrsqrt.pop %v400
        %v412 = vmul.f32 %v411, %v400
        %v413 = vmul.f32 %v412, %v411
        %v414 = vmul.f32 0.5, %v413
        %v415 = vsub.f32 1.5, %v414
        %v416 = vmul.f32 %v411, %v415
        %vm417 = vweird.f32 %v400
        %vm418 = vweird.f32 %v411
        %vm419 = vmor %vm417, %vm418
        %v420 = vsel %vm419, %v411, %v416
        %v421 = vmul.f32 %v387, %v410
        %v422 = vmul.f32 %v388, %v420
        %v423 = vadd.f32 %v374, %v421
        %v424 = vadd.f32 %v375, %v422
        %s425 = scalar_lea.vmem %s262, 32 [#allocation2]
        %v426 = vld [vmem:[%s425] sm:$0xff]
        %v427 = vld [vmem:[%s425 + $0x8] sm:$0xff]
        %v428 = vsel %vm322, %v426, 0.0
        %429 = vadd.xlane.f32.xlu0 %v428
        %v430 = vpop.xlane.xlu0 %429
        %v431 = vsel %vm322, %v427, 0.0
        %432 = vadd.xlane.f32.xlu0 %v431
        %v433 = vpop.xlane.xlu0 %432
        %v434 = vmul.f32 %v430, %v335
        %v435 = vmul.f32 %v433, %v335
        %v436 = vsub.f32 %v426, %v434
        %v437 = vsub.f32 %v427, %v435
        %v438 = vmul.f32 %v436, %v436
        %v439 = vmul.f32 %v437, %v437
        %v440 = vsel %vm322, %v438, 0.0
        %441 = vadd.xlane.f32.xlu0 %v440
        %v442 = vpop.xlane.xlu0 %441
        %v443 = vsel %vm322, %v439, 0.0
        %444 = vadd.xlane.f32.xlu0 %v443
        %v445 = vpop.xlane.xlu0 %444
        %v446 = vmul.f32 %v442, %v335
        %v447 = vmul.f32 %v445, %v335
        %v448 = vadd.f32 %v446, 1e-05
        %v449 = vadd.f32 %v447, 1e-05
        %v450 = vrsqrt.pop %v448
        %v451 = vmul.f32 %v450, %v448
        %v452 = vmul.f32 %v451, %v450
        %v453 = vmul.f32 0.5, %v452
        %v454 = vsub.f32 1.5, %v453
        %v455 = vmul.f32 %v450, %v454
        %vm456 = vweird.f32 %v448
        %vm457 = vweird.f32 %v450
        %vm458 = vmor %vm456, %vm457
        %v459 = vsel %vm458, %v450, %v455
        %v460 = vrsqrt.pop %v449
        %v461 = vmul.f32 %v460, %v449
        %v462 = vmul.f32 %v461, %v460
        %v463 = vmul.f32 0.5, %v462
        %v464 = vsub.f32 1.5, %v463
        %v465 = vmul.f32 %v460, %v464
        %vm466 = vweird.f32 %v449
        %vm467 = vweird.f32 %v460
        %vm468 = vmor %vm466, %vm467
        %v469 = vsel %vm468, %v460, %v465
        %v470 = vmul.f32 %v436, %v459
        %v471 = vmul.f32 %v437, %v469
        %v472 = vadd.f32 %v423, %v470
        %v473 = vadd.f32 %v424, %v471
        %s474 = scalar_lea.vmem %s262, 48 [#allocation2]
        %v475 = vld [vmem:[%s474] sm:$0xff]
        %v476 = vld [vmem:[%s474 + $0x8] sm:$0xff]
        %v477 = vsel %vm322, %v475, 0.0
        %478 = vadd.xlane.f32.xlu0 %v477
        %v479 = vpop.xlane.xlu0 %478
        %v480 = vsel %vm322, %v476, 0.0
        %481 = vadd.xlane.f32.xlu0 %v480
        %v482 = vpop.xlane.xlu0 %481
        %v483 = vmul.f32 %v479, %v335
        %v484 = vmul.f32 %v482, %v335
        %v485 = vsub.f32 %v475, %v483
        %v486 = vsub.f32 %v476, %v484
        %v487 = vmul.f32 %v485, %v485
        %v488 = vmul.f32 %v486, %v486
        %v489 = vsel %vm322, %v487, 0.0
        %490 = vadd.xlane.f32.xlu0 %v489
        %v491 = vpop.xlane.xlu0 %490
        %v492 = vsel %vm322, %v488, 0.0
        %493 = vadd.xlane.f32.xlu0 %v492
        %v494 = vpop.xlane.xlu0 %493
        %v495 = vmul.f32 %v491, %v335
        %v496 = vmul.f32 %v494, %v335
        %v497 = vadd.f32 %v495, 1e-05
        %v498 = vadd.f32 %v496, 1e-05
        %v499 = vrsqrt.pop %v497
        %v500 = vmul.f32 %v499, %v497
        %v501 = vmul.f32 %v500, %v499
        %v502 = vmul.f32 0.5, %v501
        %v503 = vsub.f32 1.5, %v502
        %v504 = vmul.f32 %v499, %v503
        %vm505 = vweird.f32 %v497
        %vm506 = vweird.f32 %v499
        %vm507 = vmor %vm505, %vm506
        %v508 = vsel %vm507, %v499, %v504
        %v509 = vrsqrt.pop %v498
        %v510 = vmul.f32 %v509, %v498
        %v511 = vmul.f32 %v510, %v509
        %v512 = vmul.f32 0.5, %v511
        %v513 = vsub.f32 1.5, %v512
        %v514 = vmul.f32 %v509, %v513
        %vm515 = vweird.f32 %v498
        %vm516 = vweird.f32 %v509
        %vm517 = vmor %vm515, %vm516
        %v518 = vsel %vm517, %v509, %v514
        %v519 = vmul.f32 %v485, %v508
        %v520 = vmul.f32 %v486, %v518
        %v521 = vadd.f32 %v472, %v519
        %v522 = vadd.f32 %v473, %v520
        %s523 = scalar_lea.vmem %s262, 64 [#allocation2]
        %v524 = vld [vmem:[%s523] sm:$0xff]
        %v525 = vld [vmem:[%s523 + $0x8] sm:$0xff]
        %v526 = vsel %vm322, %v524, 0.0
        %527 = vadd.xlane.f32.xlu0 %v526
        %v528 = vpop.xlane.xlu0 %527
        %v529 = vsel %vm322, %v525, 0.0
        %530 = vadd.xlane.f32.xlu0 %v529
        %v531 = vpop.xlane.xlu0 %530
        %v532 = vmul.f32 %v528, %v335
        %v533 = vmul.f32 %v531, %v335
        %v534 = vsub.f32 %v524, %v532
        %v535 = vsub.f32 %v525, %v533
        %v536 = vmul.f32 %v534, %v534
        %v537 = vmul.f32 %v535, %v535
        %v538 = vsel %vm322, %v536, 0.0
        %539 = vadd.xlane.f32.xlu0 %v538
        %v540 = vpop.xlane.xlu0 %539
        %v541 = vsel %vm322, %v537, 0.0
        %542 = vadd.xlane.f32.xlu0 %v541
        %v543 = vpop.xlane.xlu0 %542
        %v544 = vmul.f32 %v540, %v335
        %v545 = vmul.f32 %v543, %v335
        %v546 = vadd.f32 %v544, 1e-05
        %v547 = vadd.f32 %v545, 1e-05
        %v548 = vrsqrt.pop %v546
        %v549 = vmul.f32 %v548, %v546
        %v550 = vmul.f32 %v549, %v548
        %v551 = vmul.f32 0.5, %v550
        %v552 = vsub.f32 1.5, %v551
        %v553 = vmul.f32 %v548, %v552
        %vm554 = vweird.f32 %v546
        %vm555 = vweird.f32 %v548
        %vm556 = vmor %vm554, %vm555
        %v557 = vsel %vm556, %v548, %v553
        %v558 = vrsqrt.pop %v547
        %v559 = vmul.f32 %v558, %v547
        %v560 = vmul.f32 %v559, %v558
        %v561 = vmul.f32 0.5, %v560
        %v562 = vsub.f32 1.5, %v561
        %v563 = vmul.f32 %v558, %v562
        %vm564 = vweird.f32 %v547
        %vm565 = vweird.f32 %v558
        %vm566 = vmor %vm564, %vm565
        %v567 = vsel %vm566, %v558, %v563
        %v568 = vmul.f32 %v534, %v557
        %v569 = vmul.f32 %v535, %v567
        %v570 = vadd.f32 %v521, %v568
        %v571 = vadd.f32 %v522, %v569
        %s572 = scalar_lea.vmem %s262, 80 [#allocation2]
        %v573 = vld [vmem:[%s572] sm:$0xff]
        %v574 = vld [vmem:[%s572 + $0x8] sm:$0xff]
        %v575 = vsel %vm322, %v573, 0.0
        %576 = vadd.xlane.f32.xlu0 %v575
        %v577 = vpop.xlane.xlu0 %576
        %v578 = vsel %vm322, %v574, 0.0
        %579 = vadd.xlane.f32.xlu0 %v578
        %v580 = vpop.xlane.xlu0 %579
        %v581 = vmul.f32 %v577, %v335
        %v582 = vmul.f32 %v580, %v335
        %v583 = vsub.f32 %v573, %v581
        %v584 = vsub.f32 %v574, %v582
        %v585 = vmul.f32 %v583, %v583
        %v586 = vmul.f32 %v584, %v584
        %v587 = vsel %vm322, %v585, 0.0
        %588 = vadd.xlane.f32.xlu0 %v587
        %v589 = vpop.xlane.xlu0 %588
        %v590 = vsel %vm322, %v586, 0.0
        %591 = vadd.xlane.f32.xlu0 %v590
        %v592 = vpop.xlane.xlu0 %591
        %v593 = vmul.f32 %v589, %v335
        %v594 = vmul.f32 %v592, %v335
        %v595 = vadd.f32 %v593, 1e-05
        %v596 = vadd.f32 %v594, 1e-05
        %v597 = vrsqrt.pop %v595
        %v598 = vmul.f32 %v597, %v595
        %v599 = vmul.f32 %v598, %v597
        %v600 = vmul.f32 0.5, %v599
        %v601 = vsub.f32 1.5, %v600
        %v602 = vmul.f32 %v597, %v601
        %vm603 = vweird.f32 %v595
        %vm604 = vweird.f32 %v597
        %vm605 = vmor %vm603, %vm604
        %v606 = vsel %vm605, %v597, %v602
        %v607 = vrsqrt.pop %v596
        %v608 = vmul.f32 %v607, %v596
        %v609 = vmul.f32 %v608, %v607
        %v610 = vmul.f32 0.5, %v609
        %v611 = vsub.f32 1.5, %v610
        %v612 = vmul.f32 %v607, %v611
        %vm613 = vweird.f32 %v596
        %vm614 = vweird.f32 %v607
        %vm615 = vmor %vm613, %vm614
        %v616 = vsel %vm615, %v607, %v612
        %v617 = vmul.f32 %v583, %v606
        %v618 = vmul.f32 %v584, %v616
        %v619 = vadd.f32 %v570, %v617
        %v620 = vadd.f32 %v571, %v618
        %s621 = scalar_lea.vmem %s262, 96 [#allocation2]
        %v622 = vld [vmem:[%s621] sm:$0xff]
        %v623 = vld [vmem:[%s621 + $0x8] sm:$0xff]
        %v624 = vsel %vm322, %v622, 0.0
        %625 = vadd.xlane.f32.xlu0 %v624
        %v626 = vpop.xlane.xlu0 %625
        %v627 = vsel %vm322, %v623, 0.0
        %628 = vadd.xlane.f32.xlu0 %v627
        %v629 = vpop.xlane.xlu0 %628
        %v630 = vmul.f32 %v626, %v335
        %v631 = vmul.f32 %v629, %v335
        %v632 = vsub.f32 %v622, %v630
        %v633 = vsub.f32 %v623, %v631
        %v634 = vmul.f32 %v632, %v632
        %v635 = vmul.f32 %v633, %v633
        %v636 = vsel %vm322, %v634, 0.0
        %637 = vadd.xlane.f32.xlu0 %v636
        %v638 = vpop.xlane.xlu0 %637
        %v639 = vsel %vm322, %v635, 0.0
        %640 = vadd.xlane.f32.xlu0 %v639
        %v641 = vpop.xlane.xlu0 %640
        %v642 = vmul.f32 %v638, %v335
        %v643 = vmul.f32 %v641, %v335
        %v644 = vadd.f32 %v642, 1e-05
        %v645 = vadd.f32 %v643, 1e-05
        %v646 = vrsqrt.pop %v644
        %v647 = vmul.f32 %v646, %v644
        %v648 = vmul.f32 %v647, %v646
        %v649 = vmul.f32 0.5, %v648
        %v650 = vsub.f32 1.5, %v649
        %v651 = vmul.f32 %v646, %v650
        %vm652 = vweird.f32 %v644
        %vm653 = vweird.f32 %v646
        %vm654 = vmor %vm652, %vm653
        %v655 = vsel %vm654, %v646, %v651
        %v656 = vrsqrt.pop %v645
        %v657 = vmul.f32 %v656, %v645
        %v658 = vmul.f32 %v657, %v656
        %v659 = vmul.f32 0.5, %v658
        %v660 = vsub.f32 1.5, %v659
        %v661 = vmul.f32 %v656, %v660
        %vm662 = vweird.f32 %v645
        %vm663 = vweird.f32 %v656
        %vm664 = vmor %vm662, %vm663
        %v665 = vsel %vm664, %v656, %v661
        %v666 = vmul.f32 %v632, %v655
        %v667 = vmul.f32 %v633, %v665
        %v668 = vadd.f32 %v619, %v666
        %v669 = vadd.f32 %v620, %v667
        %s670 = scalar_lea.vmem %s262, 112 [#allocation2]
        %v671 = vld [vmem:[%s670] sm:$0xff]
        %v672 = vld [vmem:[%s670 + $0x8] sm:$0xff]
        %v673 = vsel %vm322, %v671, 0.0
        %674 = vadd.xlane.f32.xlu0 %v673
        %v675 = vpop.xlane.xlu0 %674
        %v676 = vsel %vm322, %v672, 0.0
        %677 = vadd.xlane.f32.xlu0 %v676
        %v678 = vpop.xlane.xlu0 %677
        %v679 = vmul.f32 %v675, %v335
        %v680 = vmul.f32 %v678, %v335
        %v681 = vsub.f32 %v671, %v679
        %v682 = vsub.f32 %v672, %v680
        %v683 = vmul.f32 %v681, %v681
        %v684 = vmul.f32 %v682, %v682
        %v685 = vsel %vm322, %v683, 0.0
        %686 = vadd.xlane.f32.xlu0 %v685
        %v687 = vpop.xlane.xlu0 %686
        %v688 = vsel %vm322, %v684, 0.0
        %689 = vadd.xlane.f32.xlu0 %v688
        %v690 = vpop.xlane.xlu0 %689
        %v691 = vmul.f32 %v687, %v335
        %v692 = vmul.f32 %v690, %v335
        %v693 = vadd.f32 %v691, 1e-05
        %v694 = vadd.f32 %v692, 1e-05
        %v695 = vrsqrt.pop %v693
        %v696 = vmul.f32 %v695, %v693
        %v697 = vmul.f32 %v696, %v695
        %v698 = vmul.f32 0.5, %v697
        %v699 = vsub.f32 1.5, %v698
        %v700 = vmul.f32 %v695, %v699
        %vm701 = vweird.f32 %v693
        %vm702 = vweird.f32 %v695
        %vm703 = vmor %vm701, %vm702
        %v704 = vsel %vm703, %v695, %v700
        %v705 = vrsqrt.pop %v694
        %v706 = vmul.f32 %v705, %v694
        %v707 = vmul.f32 %v706, %v705
        %v708 = vmul.f32 0.5, %v707
        %v709 = vsub.f32 1.5, %v708
        %v710 = vmul.f32 %v705, %v709
        %vm711 = vweird.f32 %v694
        %vm712 = vweird.f32 %v705
        %vm713 = vmor %vm711, %vm712
        %v714 = vsel %vm713, %v705, %v710
        %v715 = vmul.f32 %v681, %v704
        %v716 = vmul.f32 %v682, %v714
        %v717 = vadd.f32 %v668, %v715
        %v718 = vadd.f32 %v669, %v716
        %v719 = vmul.f32 %v717, 0.125
        %v720 = vmul.f32 %v718, 0.125
        %v721 = vld [vmem:[%s1] sm:$0xff]
        %v722 = vld [vmem:[%s1 + $0x8] sm:$0xff]
        %v723 = vld [vmem:[%s1 + $0x10] sm:$0xff]
        %v724 = vld [vmem:[%s1 + $0x18] sm:$0xff]
        %v725 = vld [vmem:[%s1 + $0x20] sm:$0xf]
        %v726 = vld [vmem:[%s2] sm:$0xff]
        %v727 = vld [vmem:[%s2 + $0x8] sm:$0xff]
        %v728 = vld [vmem:[%s2 + $0x10] sm:$0xff]
        %v729 = vld [vmem:[%s2 + $0x18] sm:$0xff]
        %v730 = vld [vmem:[%s2 + $0x20] sm:$0xf]
        %v731 = vld [vmem:[%s3] sm:$0xff]
        %v732 = vld [vmem:[%s3 + $0x8] sm:$0xff]
        %v733 = vld [vmem:[%s3 + $0x10] sm:$0xff]
        %v734 = vld [vmem:[%s3 + $0x18] sm:$0xff]
        %v735 = vld [vmem:[%s3 + $0x20] sm:$0xf]
        %737 = vset.pattern.permute.xlu0 0
        %738 = vperm.xlu0 %737, %v731
        %v739 = vpop.permute.xlu0 %738
        %742 = vset.pattern.permute.xlu0 0
        %743 = vperm.xlu0 %742, %v732
        %v744 = vpop.permute.xlu0 %743
        %747 = vset.pattern.permute.xlu0 0
        %748 = vperm.xlu0 %747, %v733
        %v749 = vpop.permute.xlu0 %748
        %752 = vset.pattern.permute.xlu0 0
        %753 = vperm.xlu0 %752, %v734
        %v754 = vpop.permute.xlu0 %753
        %757 = vset.pattern.permute.xlu0 0
        %758 = vperm.xlu0 %757, %v735
        %v759 = vpop.permute.xlu0 %758
        %v762 = vsel %vm322, %v721, 0
        %v765 = vsel %vm322, %v722, 0
        %v768 = vsel %vm322, %v723, 0
        %v771 = vsel %vm322, %v724, 0
        %v774 = vsel %vm322, %v725, 0
        %v777 = vsel %vm322, %v719, 0
        %v780 = vsel %vm322, %v720, 0
        %782 = vmatpush.xpose.msra.mxu0 0.0
        %783 = vmatpush.xpose.msra.mxu0 0.0
        %784 = vmatpush.xpose.msra.mxu0 0.0
        %785 = vmatpush.xpose.msra.mxu0 0.0
        %786 = vmatpush.xpose.msra.mxu0 0.0
        %787 = vmatpush.xpose.msra.mxu0 0.0
        %788 = vmatpush.xpose.msra.mxu0 0.0
        %789 = vmatpush.xpose.msra.mxu0 0.0
        %790 = vmatpush.xpose.msra.mxu0 0.0
        %791 = vmatpush.xpose.msra.mxu0 0.0
        %792 = vmatpush.xpose.msra.mxu0 0.0
        %793 = vmatpush.xpose.msra.mxu0 0.0
        %794 = vmatpush.xpose.msra.mxu0 0.0
        %795 = vmatpush.xpose.msra.mxu0 0.0
        %796 = vmatpush.xpose.msra.mxu0 %v780
        %797 = vmatpush.xpose.msra.mxu0 %v777
        %798 = vmatmul.f32.gmra.mxu0 %v762
        %v799 = vpop.f32.mrf.mxu0
        %v800 = vadd.f32 %v739, %v799
        %801 = vmatmul.f32.gmra.mxu0 %v765
        %v802 = vpop.f32.mrf.mxu0
        %v803 = vadd.f32 %v744, %v802
        %804 = vmatmul.f32.gmra.mxu0 %v768
        %v805 = vpop.f32.mrf.mxu0
        %v806 = vadd.f32 %v749, %v805
        %807 = vmatmul.f32.gmra.mxu0 %v771
        %v808 = vpop.f32.mrf.mxu0
        %v809 = vadd.f32 %v754, %v808
        %810 = vmatmul.f32.gmra.mxu0 %v774
        %v811 = vpop.f32.mrf.mxu0
        %v812 = vadd.f32 %v759, %v811
        %813 = vdwg.mxu0
        %vm814 = vcmask 130048
        %815 = vst.msk [vmem:[%s311] sm:$0xff] %vm814, %v800
        %816 = vst.msk [vmem:[%s311 + $0x8] sm:$0xff] %vm814, %v803
        %817 = vst.msk [vmem:[%s311 + $0x10] sm:$0xff] %vm814, %v806
        %818 = vst.msk [vmem:[%s311 + $0x18] sm:$0xff] %vm814, %v809
        %vm819 = vcmask 125952
        %820 = vst.msk [vmem:[%s311 + $0x20] sm:$0xf] %vm819, %v812
        %v821 = vld [vmem:[%s4] sm:$0xff]
        %v822 = vld [vmem:[%s4 + $0x8] sm:$0xff]
        %v823 = vld [vmem:[%s4 + $0x10] sm:$0xff]
        %v824 = vld [vmem:[%s4 + $0x18] sm:$0xff]
        %v825 = vld [vmem:[%s4 + $0x20] sm:$0xf]
        %827 = vset.pattern.permute.xlu0 0
        %828 = vperm.xlu0 %827, %v821
        %v829 = vpop.permute.xlu0 %828
        %832 = vset.pattern.permute.xlu0 0
        %833 = vperm.xlu0 %832, %v822
        %v834 = vpop.permute.xlu0 %833
        %837 = vset.pattern.permute.xlu0 0
        %838 = vperm.xlu0 %837, %v823
        %v839 = vpop.permute.xlu0 %838
        %842 = vset.pattern.permute.xlu0 0
        %843 = vperm.xlu0 %842, %v824
        %v844 = vpop.permute.xlu0 %843
        %847 = vset.pattern.permute.xlu0 0
        %848 = vperm.xlu0 %847, %v825
        %v849 = vpop.permute.xlu0 %848
        %v852 = vsel %vm322, %v726, 0
        %v855 = vsel %vm322, %v727, 0
        %v858 = vsel %vm322, %v728, 0
        %v861 = vsel %vm322, %v729, 0
        %v864 = vsel %vm322, %v730, 0
        %866 = vmatpush.xpose.msra.mxu0 0.0
        %867 = vmatpush.xpose.msra.mxu0 0.0
        %868 = vmatpush.xpose.msra.mxu0 0.0
        %869 = vmatpush.xpose.msra.mxu0 0.0
        %870 = vmatpush.xpose.msra.mxu0 0.0
        %871 = vmatpush.xpose.msra.mxu0 0.0
        %872 = vmatpush.xpose.msra.mxu0 0.0
        %873 = vmatpush.xpose.msra.mxu0 0.0
        %874 = vmatpush.xpose.msra.mxu0 0.0
        %875 = vmatpush.xpose.msra.mxu0 0.0
        %876 = vmatpush.xpose.msra.mxu0 0.0
        %877 = vmatpush.xpose.msra.mxu0 0.0
        %878 = vmatpush.xpose.msra.mxu0 0.0
        %879 = vmatpush.xpose.msra.mxu0 0.0
        %880 = vmatpush.xpose.msra.mxu0 %v780
        %881 = vmatpush.xpose.msra.mxu0 %v777
        %882 = vmatmul.f32.gmra.mxu0 %v852
        %v883 = vpop.f32.mrf.mxu0
        %v884 = vadd.f32 %v829, %v883
        %885 = vmatmul.f32.gmra.mxu0 %v855
        %v886 = vpop.f32.mrf.mxu0
        %v887 = vadd.f32 %v834, %v886
        %888 = vmatmul.f32.gmra.mxu0 %v858
        %v889 = vpop.f32.mrf.mxu0
        %v890 = vadd.f32 %v839, %v889
        %891 = vmatmul.f32.gmra.mxu0 %v861
        %v892 = vpop.f32.mrf.mxu0
        %v893 = vadd.f32 %v844, %v892
        %894 = vmatmul.f32.gmra.mxu0 %v864
        %v895 = vpop.f32.mrf.mxu0
        %v896 = vadd.f32 %v849, %v895
        %897 = vdwg.mxu0
        %898 = vst.msk [vmem:[%s319] sm:$0xff] %vm814, %v884
        %899 = vst.msk [vmem:[%s319 + $0x8] sm:$0xff] %vm814, %v887
        %900 = vst.msk [vmem:[%s319 + $0x10] sm:$0xff] %vm814, %v890
        %901 = vst.msk [vmem:[%s319 + $0x18] sm:$0xff] %vm814, %v893
        %902 = vst.msk [vmem:[%s319 + $0x20] sm:$0xf] %vm819, %v896
        %p903 = scmp.lt.s32.totalorder %s25, 1
        %s904 = scalar_select %p903, %s25, 1
        %p905 = scmp.lt.s32.totalorder %s26, 0
        %s906 = scalar_select %p905, %s26, 0
        %s907 = smul.addr %s904, 5
        %s908 = sadd.s32 %s906, %s907
        %s909 = smul.addr %s908, 8
        %s910 = scalar_lea.vmem %s5, %s909
        %p911 = scmp.lt.s32.totalorder %s25, 1
        %s912 = scalar_select %p911, %s25, 1
        %p913 = scmp.lt.s32.totalorder %s26, 0
        %s914 = scalar_select %p913, %s26, 0
        %s915 = smul.addr %s912, 5
        %s916 = sadd.s32 %s914, %s915
        %s917 = smul.addr %s916, 8
        %s918 = scalar_lea.vmem %s6, %s917
        // Predicated region
        $region45: #{tpu_custom_call.1} parent=39 // pred_check
          %p919 = pneg %p165
        $region46: #{tpu_custom_call.1} parent=39 // pred_check_branch
          %921 = sbr.rel (%p919) target = $region48
        $region47: #{tpu_custom_call.1} parent=39 // pred_region
          _
        $region48: #{tpu_custom_call.1} parent=39 // pred_fallthru
          _
        // Predicated region
        $region49: #{tpu_custom_call.1} parent=39 // pred_check
          %p922 = pneg %p193
        $region50: #{tpu_custom_call.1} parent=39 // pred_check_branch
          %924 = sbr.rel (%p922) target = $region52
        $region51: #{tpu_custom_call.1} parent=39 // pred_region
          _
        $region52: #{tpu_custom_call.1} parent=39 // pred_fallthru
          _
      $region40: #{tpu_custom_call.1} parent=5 // pred_fallthru
        _
      %p925 = scmp.le.s32.totalorder 2, %s16
      // Predicated region
      $region53: #{tpu_custom_call.1} parent=5 // pred_check
        %p926 = pneg %p925
      $region54: #{tpu_custom_call.1} parent=5 // pred_check_branch
        %928 = sbr.rel (%p926) target = $region56
      $region55: #{tpu_custom_call.1} parent=5 // pred_region
        %s929 = ssub.s32 %s16, 2
        // Predicated region
        $region57: #{tpu_custom_call.1} parent=55 // pred_check
          %p930 = pneg %p171
        $region58: #{tpu_custom_call.1} parent=55 // pred_check_branch
          %932 = sbr.rel (%p930) target = $region60
        $region59: #{tpu_custom_call.1} parent=55 // pred_region
          %p933 = scmp.lt.s32.totalorder %s27, 1
          %s934 = scalar_select %p933, %s27, 1
          %p935 = scmp.lt.s32.totalorder %s28, 0
          %s936 = scalar_select %p935, %s28, 0
          %s937 = smul.addr %s934, 5
          %s938 = sadd.s32 %s936, %s937
          %s939 = smul.addr %s938, 8
          %s940 = scalar_lea.vmem %s5, %s939
        $region60: #{tpu_custom_call.1} parent=55 // pred_fallthru
          _
        // Predicated region
        $region61: #{tpu_custom_call.1} parent=55 // pred_check
          %p941 = pneg %p199
        $region62: #{tpu_custom_call.1} parent=55 // pred_check_branch
          %943 = sbr.rel (%p941) target = $region64
        $region63: #{tpu_custom_call.1} parent=55 // pred_region
          %p944 = scmp.lt.s32.totalorder %s27, 1
          %s945 = scalar_select %p944, %s27, 1
          %p946 = scmp.lt.s32.totalorder %s28, 0
          %s947 = scalar_select %p946, %s28, 0
          %s948 = smul.addr %s945, 5
          %s949 = sadd.s32 %s947, %s948
          %s950 = smul.addr %s949, 8
          %s951 = scalar_lea.vmem %s6, %s950
        $region64: #{tpu_custom_call.1} parent=55 // pred_fallthru
          _
      $region56: #{tpu_custom_call.1} parent=5 // pred_fallthru
        _
    $region6: #{tpu_custom_call.1} parent=1 // loop_footer
      %s20 = sadd.s32 1, %s16
    $region7: #{tpu_custom_call.1} parent=1 // loop_footer_branch
      %15 = sbr.rel target = $region3
    $region8: #{tpu_custom_call.1} parent=1 // loop_exit
      _
    %952 = vsyncpa [#allocation3], 1
    %s953 = scalar_lea.sflag [#allocation3], 1
    %954 = vsyncpa %s953, 1

</llo_original>
